<compile_context>
chip_gen: v6e
topology: v6e:2x2x1
jax: 0.10.0
libtpu: 0.0.40
codegen_flags: <defaults>
</compile_context>

<pallas_src>
import functools
import math

import jax
import jax.numpy as jnp
from jax.experimental import pallas as pl
from jax.experimental.pallas import tpu as pltpu

# ---------------- small synthetic configuration ----------------
B = 2            # batch
V = 1            # reference views
RES = 16         # tri-plane resolution   (PyTorch: 256)
C = 32           # feature dim            (PyTorch: 32)
H = W = 16       # rendered image size    (PyTorch: 128 -> 512 SR)
S = 8            # samples per ray        (PyTorch: 32)
P = 128          # FLAME points           (PyTorch: 5023)
N_SHAPE = 16     # shape coeffs           (PyTorch: 100)
N_EXP = 8        # expression coeffs      (PyTorch: 50)
BOX = 12.0       # CubicNeRFCamera(12.0, ...)
NEAR, FAR = 6.0, 14.0
HIDDEN = 64

RAYS_PER_TILE = 128                    # rays per fused-render grid step (M = 1024 samples)


def _default_vmem_limit():
    # ~half of physical VMEM (v5e/v6e: 64 MiB, v7x: 32 MiB), capped at 96 MiB.
    try:
        phys = int(pltpu.get_tpu_info().vmem_capacity_bytes)
    except Exception:
        phys = 64 * 1024 * 1024
    return int(min(phys // 2, 96 * 1024 * 1024))


VMEM_LIMIT = _default_vmem_limit()


# ============================ Pallas kernels ============================

# ---- K=3 "1x1 conv" (StyleUNet encoder proxy): VPU broadcast-MACs, row-tiled ----
def _linear3_kernel(x_ref, w_ref, b_ref, o_ref):
    x = x_ref[...]                       # [tm, 3]
    w = w_ref[...]                       # [3, Npad]
    y = (x[:, 0:1] * w[0:1, :]
         + x[:, 1:2] * w[1:2, :]
         + x[:, 2:3] * w[2:3, :]) + b_ref[...]
    o_ref[...] = y.astype(o_ref.dtype)


def pallas_linear3(x, w, b, block_rows=1024):
    m, k = x.shape
    n = w.shape[1]
    n_pad = max(128, ((n + 127) // 128) * 128)          # lane-dense output
    tm = min(block_rows, ((m + 7) // 8) * 8)
    m_pad = ((m + tm - 1) // tm) * tm                    # rows padded -> no oversized fallback block
    x_p = jnp.pad(x, ((0, m_pad - m), (0, 0))) if m_pad != m else x
    w_p = jnp.pad(w, ((0, 0), (0, n_pad - n)))
    b_p = jnp.pad(b, (0, n_pad - n)).reshape(1, n_pad)
    out = pl.pallas_call(
        _linear3_kernel,
        grid=(m_pad // tm,),
        out_shape=jax.ShapeDtypeStruct((m_pad, n_pad), jnp.float32),
        in_specs=[pl.BlockSpec((tm, k), lambda i: (i, 0)),
                  pl.BlockSpec((k, n_pad), lambda i: (0, 0)),
                  pl.BlockSpec((1, n_pad), lambda i: (0, 0))],
        out_specs=pl.BlockSpec((tm, n_pad), lambda i: (i, 0)),
        compiler_params=pltpu.CompilerParams(
            dimension_semantics=("parallel",),
            vmem_limit_bytes=VMEM_LIMIT),
    )(x_p.astype(jnp.float32), w_p.astype(jnp.float32), b_p.astype(jnp.float32))
    return out[:m, :n]


# ---- MTAttention: fused qkv (one [C,3C] matmul) / out projection + softmax attention ----
# TODO(synk): production v*h*w = 16384 kv tokens needs a kv-tiled flash-style
# online softmax (scores alone are 16 MiB per step); single-block here.
def _mtattn_kernel(q_ref, kv_ref, wqkv_ref, bqkv_ref, wo_ref, bo_ref, o_ref):
    d = q_ref.shape[-1]
    qt = q_ref[0]                        # [Nq, C] bf16
    kvt = kv_ref[0]                      # [Nk, C] bf16
    qh = jnp.dot(qt, wqkv_ref[...], preferred_element_type=jnp.float32) + bqkv_ref[...]
    kvh = jnp.dot(kvt, wqkv_ref[...], preferred_element_type=jnp.float32) + bqkv_ref[...]
    q = qh[:, :d]
    k = kvh[:, d:2 * d]
    v = kvh[:, 2 * d:3 * d]
    scale = 1.0 / math.sqrt(d)
    # contract last dims directly (no explicit transpose of k)
    s = jax.lax.dot_general(q.astype(jnp.bfloat16), k.astype(jnp.bfloat16),
                            (((1,), (1,)), ((), ())),
                            preferred_element_type=jnp.float32) * scale
    s = s - jnp.max(s, axis=-1, keepdims=True)
    p = jnp.exp(s)
    p = p / jnp.sum(p, axis=-1, keepdims=True)
    o = jnp.dot(p.astype(jnp.bfloat16), v.astype(jnp.bfloat16),
                preferred_element_type=jnp.float32)
    out = jnp.dot(o.astype(jnp.bfloat16), wo_ref[...],
                  preferred_element_type=jnp.float32) + bo_ref[...]
    o_ref[0] = out.astype(o_ref.dtype)


def pallas_mt_attention(q_tok, kv_tok, params):
    # TODO(synk): single-head attention; if the reference MTAttention is
    # multi-head, per-head reshape/scale is not reproduced here.
    g, nq, d = q_tok.shape
    nk = kv_tok.shape[1]
    wqkv = jnp.concatenate([params["attn_wq"], params["attn_wk"], params["attn_wv"]],
                           axis=1)                                   # [C, 3C]
    bqkv = jnp.concatenate([params["attn_bq"], params["attn_bk"], params["attn_bv"]]
                           ).reshape(1, 3 * d)
    return pl.pallas_call(
        _mtattn_kernel,
        grid=(g,),
        out_shape=jax.ShapeDtypeStruct((g, nq, d), jnp.float32),
        in_specs=[pl.BlockSpec((1, nq, d), lambda i: (i, 0, 0)),
                  pl.BlockSpec((1, nk, d), lambda i: (i, 0, 0)),
                  pl.BlockSpec((d, 3 * d), lambda i: (0, 0)),
                  pl.BlockSpec((1, 3 * d), lambda i: (0, 0)),
                  pl.BlockSpec((d, d), lambda i: (0, 0)),
                  pl.BlockSpec((1, d), lambda i: (0, 0))],
        out_specs=pl.BlockSpec((1, nq, d), lambda i: (i, 0, 0)),
        compiler_params=pltpu.CompilerParams(
            dimension_semantics=("parallel",),
            vmem_limit_bytes=VMEM_LIMIT),
    )(q_tok.astype(jnp.bfloat16), kv_tok.astype(jnp.bfloat16),
      wqkv.astype(jnp.bfloat16), bqkv,
      params["attn_wproj"].astype(jnp.bfloat16), params["attn_bproj"].reshape(1, d))


# ---- fused renderer: triplane gather + sqdist mod + MLP + volume render + 1x1 proj ----
def _render_kernel(pts_ref, planes_ref, flame_ref,
                   w1_ref, b1_ref, w2_ref, b2_ref, upw_ref, upb_ref, o_ref,
                   *, s_per_ray, rays_per_tile, res, dt, background):
    m = rays_per_tile * s_per_ray
    rr = res * res

    pts = pts_ref[...]                   # [M, 3] f32 in [-1, 1]
    px = pts[:, 0:1]
    py = pts[:, 1:2]
    pz = pts[:, 2:3]

    # --- tri-plane bilinear gather: one fused K=3*RR interp-weight matmul ---
    # TODO(synk): at production RES=256 this interp-weight matmul must become a
    # DMA / pl.Element row gather; at RES=16 the [M, 3*RR] matrix is tiny.
    lane = jax.lax.broadcasted_iota(jnp.int32, (m, rr), 1)   # built once, shared

    def corner_weights(u, v):
        uu = (u * 0.5 + 0.5) * (res - 1)
        vv = (v * 0.5 + 0.5) * (res - 1)
        u0 = jnp.clip(jnp.floor(uu), 0.0, res - 2.0)
        v0 = jnp.clip(jnp.floor(vv), 0.0, res - 2.0)
        fu = uu - u0
        fv = vv - v0
        base = v0.astype(jnp.int32) * res + u0.astype(jnp.int32)   # [M, 1]
        off = lane - base                                          # computed once per plane
        w = (jnp.where(off == 0, (1.0 - fu) * (1.0 - fv), 0.0)
             + jnp.where(off == 1, fu * (1.0 - fv), 0.0)
             + jnp.where(off == res, (1.0 - fu) * fv, 0.0)
             + jnp.where(off == res + 1, fu * fv, 0.0))
        return w.astype(jnp.bfloat16)

    wall = jnp.concatenate([corner_weights(px, py),
                            corner_weights(px, pz),
                            corner_weights(py, pz)], axis=-1)       # [M, 3*RR] bf16
    feats = jnp.dot(wall, planes_ref[0],
                    preferred_element_type=jnp.float32)             # [M, C] f32

    # --- min squared distance to FLAME points (pure VPU; never negative) ---
    # TODO(synk): at production P=5023 chunk the P loop (running min) instead
    # of materializing the full [M, P] distance tensor.
    fl = flame_ref[0]                    # [3, P]
    dx = px - fl[0:1, :]
    dy = py - fl[1:2, :]
    dz = pz - fl[2:3, :]
    d2 = dx * dx + dy * dy + dz * dz     # [M, P]
    mind = jnp.min(d2, axis=-1, keepdims=True)
    feats = feats * jnp.exp(-4.0 * mind)

    # --- fused 2-layer nerf_mlp (bf16 MXU, f32 accumulation / elementwise) ---
    h = jnp.dot(feats.astype(jnp.bfloat16), w1_ref[...],
                preferred_element_type=jnp.float32) + b1_ref[...]
    h = jnp.maximum(h, 0.0)
    raw = jnp.dot(h.astype(jnp.bfloat16), w2_ref[...],
                  preferred_element_type=jnp.float32) + b2_ref[...]   # [M, 1+C]
    sigma = raw[:, 0:1]                   # [M, 1]
    rgbf = raw[:, 1:]                     # [M, C]
    c_feat = rgbf.shape[-1]

    # --- volume rendering: per-ray exclusive prefix sum, no O(M^2) mask ---
    # (M,1)->(TR,S,1) / (M,C)->(TR,S,C) are layout no-ops since S == 8 sublanes.
    srel3 = jnp.maximum(sigma, 0.0).reshape(rays_per_tile, s_per_ray, 1)
    rgb3 = rgbf.reshape(rays_per_tile, s_per_ray, c_feat)
    pos = jax.lax.broadcasted_iota(jnp.int32, (rays_per_tile, s_per_ray, 1), 1)
    cum3 = jnp.zeros_like(srel3)                                    # exclusive prefix sum of sigma
    run = srel3[:, 0:1, :]
    for s_i in range(1, s_per_ray):                                 # S=8: tiny unrolled VPU scan
        cum3 = cum3 + jnp.where(pos == s_i, run, 0.0)
        run = run + srel3[:, s_i:s_i + 1, :]
    alpha3 = 1.0 - jnp.exp(-srel3 * dt)
    wgt3 = jnp.exp(-dt * cum3) * alpha3                             # [TR, S, 1]
    acc = jnp.sum(wgt3 * rgb3, axis=1)                              # [TR, C]  segment-sum over S
    wsum = jnp.sum(wgt3, axis=1)                                    # [TR, 1]
    gen_fine = acc + background * (1.0 - wsum)

    # --- up_renderer proxy: bf16 1x1 projection into a lane-dense 128-wide output ---
    rgb = jnp.dot(gen_fine.astype(jnp.bfloat16), upw_ref[...],
                  preferred_element_type=jnp.float32) + upb_ref[...]
    o_ref[...] = rgb.astype(o_ref.dtype)


def pallas_render(pts_n_flat, planes_flat, flame_n,
                  mlp_w1, mlp_b1, mlp_w2, mlp_b2, up_w_pad, up_b_pad,
                  *, rays_per_tile, s_per_ray, res, dt, background):
    total_pts = pts_n_flat.shape[0]
    m_tile = rays_per_tile * s_per_ray
    assert total_pts % m_tile == 0
    n_tiles = total_pts // m_tile
    total_rays = total_pts // s_per_ray
    b = planes_flat.shape[0]
    assert n_tiles % b == 0
    n_rt = n_tiles // b                  # ray tiles per batch element
    rr = res * res
    c = planes_flat.shape[-1]
    hidden = mlp_w1.shape[-1]
    n_out = up_w_pad.shape[-1]
    p_pts = flame_n.shape[-1]

    kernel = functools.partial(
        _render_kernel, s_per_ray=s_per_ray, rays_per_tile=rays_per_tile,
        res=res, dt=dt, background=background)

    return pl.pallas_call(
        kernel,
        grid=(n_tiles,),
        out_shape=jax.ShapeDtypeStruct((total_rays, n_out), jnp.float32),
        in_specs=[
            pl.BlockSpec((m_tile, 3), lambda i: (i, 0)),                  # sample points
            pl.BlockSpec((1, 3 * rr, c), lambda i: (i // n_rt, 0, 0)),    # tri-planes (bf16)
            pl.BlockSpec((1, 3, p_pts), lambda i: (i // n_rt, 0, 0)),     # FLAME points
            pl.BlockSpec((c, hidden), lambda i: (0, 0)),
            pl.BlockSpec((1, hidden), lambda i: (0, 0)),
            pl.BlockSpec((hidden, c + 1), lambda i: (0, 0)),
            pl.BlockSpec((1, c + 1), lambda i: (0, 0)),
            pl.BlockSpec((c, n_out), lambda i: (0, 0)),
            pl.BlockSpec((1, n_out), lambda i: (0, 0)),
        ],
        out_specs=pl.BlockSpec((rays_per_tile, n_out), lambda i: (i, 0)),
        compiler_params=pltpu.CompilerParams(
            dimension_semantics=("parallel",),
            vmem_limit_bytes=VMEM_LIMIT),
    )(pts_n_flat, planes_flat, flame_n,
      mlp_w1, mlp_b1, mlp_w2, mlp_b2, up_w_pad, up_b_pad)


# ============================ JAX glue ============================

def init_params(key):
    ks = jax.random.split(key, 16)
    p = {}
    # flame_lite (template + concatenated shape/expression blendshape dirs)
    p["flame_template"] = 0.5 * jax.random.normal(ks[0], (P * 3,), jnp.float32)
    p["flame_dirs"] = 0.05 * jax.random.normal(ks[1], (N_SHAPE + N_EXP, P * 3), jnp.float32)
    # style_tplane encoder proxy (3 -> 3*C per pixel)
    p["enc_w"] = 0.3 * jax.random.normal(ks[2], (3, 3 * C), jnp.float32)
    p["enc_b"] = jnp.zeros((3 * C,), jnp.float32)
    # learnable query tri-plane
    p["query_style_tplane"] = jax.random.normal(ks[3], (1, 1, 3, C, RES, RES), jnp.float32)
    # MTAttention (dim=32, qkv_bias=True)
    for i, name in enumerate(["q", "k", "v", "proj"]):
        p[f"attn_w{name}"] = (1.0 / math.sqrt(C)) * jax.random.normal(ks[4 + i], (C, C), jnp.float32)
        p[f"attn_b{name}"] = jnp.zeros((C,), jnp.float32)
    # nerf_mlp (PointsDecoder in_dim=32 -> out_dim=32 + density)
    p["mlp_w1"] = 0.3 * jax.random.normal(ks[8], (C, HIDDEN), jnp.float32)
    p["mlp_b1"] = jnp.zeros((HIDDEN,), jnp.float32)
    p["mlp_w2"] = 0.3 * jax.random.normal(ks[9], (HIDDEN, C + 1), jnp.float32)
    p["mlp_b2"] = jnp.concatenate([0.5 * jnp.ones((1,), jnp.float32), jnp.zeros((C,), jnp.float32)])
    # up_renderer proxy (32 -> 3)
    p["up_w"] = 0.3 * jax.random.normal(ks[10], (C, 3), jnp.float32)
    p["up_b"] = jnp.zeros((3,), jnp.float32)
    return p


def _small_rotation(w):
    z = jnp.zeros((), jnp.float32)
    wx, wy, wz = w[0], w[1], w[2]
    K = jnp.stack([jnp.stack([z, -wz, wy]),
                   jnp.stack([wz, z, -wx]),
                   jnp.stack([-wy, wx, z])])
    return jnp.eye(3, dtype=jnp.float32) + K + 0.5 * (K @ K)


def build_avatar(params, inp_image, inp_shape, inp_trans):
    # inp_image: [B, V, 3, h, w]  (per-view NCHW like the PyTorch module)
    b, v, c, h, w = inp_image.shape
    img = jnp.flip(inp_image, axis=-2)                        # .flip(dims=(-2,))
    pix = img.transpose(0, 1, 3, 4, 2).reshape(-1, c)         # [B*V*h*w, 3]
    # TODO(synk): StyleUNet encoder (conv U-Net) reduced to a per-pixel linear projection.
    tex = pallas_linear3(pix, params["enc_w"], params["enc_b"])              # [B*V*h*w, 3*C]
    tex_tplanes = tex.reshape(b, v, h, w, 3, C).transpose(0, 1, 4, 5, 2, 3)  # [B,V,3,C,h,w]

    # MTAttention: query tri-plane tokens attend to reference tri-plane tokens.
    q_planes = jnp.broadcast_to(params["query_style_tplane"][:, 0], (b, 3, C, RES, RES))
    q_tok = q_planes.transpose(0, 1, 3, 4, 2).reshape(b * 3, RES * RES, C)
    kv_tok = tex_tplanes.transpose(0, 2, 1, 4, 5, 3).reshape(b * 3, v * h * w, C)

    o = pallas_mt_attention(q_tok, kv_tok, params)            # fused qkv + attn + out-proj
    texture_planes = o.reshape(b, 3, RES, RES, C).transpose(0, 1, 4, 2, 3)   # [B,3,C,RES,RES]
    return {"texture_planes": texture_planes, "inp_shape": inp_shape, "inp_trans": inp_trans}


def forward(params, avatar, expression, pose, transform_matrix=None):
    b = expression.shape[0]

    # ---- flame_lite: blendshape matmul (plain XLA; too small for a pallas_call) ----
    # TODO(synk): full FLAME LBS / per-joint pose blendshapes are not reproduced.
    shape_b = jnp.broadcast_to(avatar["inp_shape"][None], (b, N_SHAPE))
    coeffs = jnp.concatenate([shape_b, expression], axis=-1)                 # [B, N_SHAPE+N_EXP]
    verts = (jnp.dot(coeffs, params["flame_dirs"]) + params["flame_template"]).reshape(b, P, 3)
    Rg = jax.vmap(_small_rotation)(pose[:, :3])
    points = jnp.einsum("bij,bpj->bpi", Rg, verts) * 5.0                     # world-space FLAME points

    if transform_matrix is None:
        transform_matrix = avatar["inp_trans"]
    Rm, t = transform_matrix[:, :, :3], transform_matrix[:, :, 3]

    # ---- CubicNeRFCamera: ray construction + stratified depths (glue) ----
    ys = jnp.linspace(-1.0, 1.0, H)
    xs = jnp.linspace(-1.0, 1.0, W)
    gy, gx = jnp.meshgrid(ys, xs, indexing="ij")
    dirs_cam = jnp.stack([0.5 * gx, 0.5 * gy, jnp.ones_like(gx)], axis=-1)
    dirs_cam = dirs_cam / jnp.linalg.norm(dirs_cam, axis=-1, keepdims=True)
    dirs = jnp.einsum("bij,hwj->bhwi", Rm, dirs_cam)                         # [B,H,W,3]
    z = jnp.linspace(NEAR, FAR, S)
    pts = t[:, None, None, None, :] + dirs[:, :, :, None, :] * z[None, None, None, :, None]
    pts_n = jnp.clip(pts.reshape(b * H * W * S, 3) / BOX, -1.0, 1.0)         # [B*HW*S, 3]

    # ---- fused render kernel inputs ----
    # TODO(synk): plane-axis ordering (xy/xz/yz vs grid_sample convention) should be
    # verified against the PyTorch reference.
    planes_flat = (avatar["texture_planes"].transpose(0, 1, 3, 4, 2)
                   .reshape(b, 3 * RES * RES, C).astype(jnp.bfloat16))       # [B, 3*RR, C]
    flame_n = jnp.clip(points / BOX, -1.0, 1.0).transpose(0, 2, 1)           # [B, 3, P]
    up_w_pad = jnp.pad(params["up_w"],
                       ((0, 0), (0, 128 - params["up_w"].shape[1]))).astype(jnp.bfloat16)
    up_b_pad = jnp.pad(params["up_b"], (0, 128 - params["up_b"].shape[0])).reshape(1, 128)

    assert (H * W) % RAYS_PER_TILE == 0                      # no ray tile straddles a batch boundary
    dt = (FAR - NEAR) / S
    rgb_pad = pallas_render(
        pts_n, planes_flat, flame_n,
        params["mlp_w1"].astype(jnp.bfloat16), params["mlp_b1"].reshape(1, HIDDEN),
        params["mlp_w2"].astype(jnp.bfloat16), params["mlp_b2"].reshape(1, C + 1),
        up_w_pad, up_b_pad,
        rays_per_tile=RAYS_PER_TILE, s_per_ray=S, res=RES, dt=dt, background=0.0)

    # TODO(synk): up_renderer StyleUNet SR (multi-scale convs / upsample-to-512)
    # reduced to the fused 1x1 projection above.
    rgb = rgb_pad[:, :3]
    gen_sr = rgb.reshape(b, H, W, 3).transpose(0, 3, 1, 2)                   # NCHW output
    return gen_sr


# ============================ main ============================

if __name__ == "__main__":
    key = jax.random.PRNGKey(0)
    kp, k1, k2, k3, k4 = jax.random.split(key, 5)
    params = init_params(kp)

    # build_avatar inputs (synthetic tracking data)
    inp_image = jax.random.uniform(k1, (B, V, 3, RES, RES), jnp.float32)
    inp_shape = 0.1 * jax.random.normal(k2, (N_SHAPE,), jnp.float32)
    Rm = jnp.broadcast_to(jnp.eye(3, dtype=jnp.float32), (B, 3, 3))
    tvec = jnp.tile(jnp.array([[0.0, 0.0, -10.0]], jnp.float32), (B, 1))
    inp_trans = jnp.concatenate([Rm, tvec[:, :, None]], axis=-1)             # [B, 3, 4]

    avatar = build_avatar(params, inp_image, inp_shape, inp_trans)

    # forward inputs
    expression = 0.1 * jax.random.normal(k3, (B, N_EXP), jnp.float32)
    pose = 0.05 * jax.random.normal(k4, (B, 6), jnp.float32)

    out = forward(params, avatar, expression, pose)
    out = jax.block_until_ready(out)
    assert out.shape == (B, 3, H, W), out.shape
    assert bool(jnp.all(jnp.isfinite(out)))
    print("KERNEL_OK")
</pallas_src>

<mosaic_0001>
module attributes {stable_mosaic.version = 11 : i64} {
  func.func @_linear3_kernel(%arg0: i32, %arg1: memref<512x3xf32, #tpu.memory_space<vmem>>, %arg2: memref<3x128xf32, #tpu.memory_space<vmem>>, %arg3: memref<1x128xf32, #tpu.memory_space<vmem>>, %arg4: memref<512x128xf32, #tpu.memory_space<vmem>>) attributes {dimension_semantics = [#tpu.dimension_semantics<parallel>], iteration_bounds = array<i64: 1>, scalar_prefetch = 0 : i64, scratch_operands = 0 : i64, tpu.core_type = #tpu.core_type<tc>, window_params = [{transform_indices = @transform_0, window_bounds = array<i64: 512, 3>}, {pipeline_mode = #tpu.pipeline_mode<synchronous>, transform_indices = @transform_1, window_bounds = array<i64: 3, 128>}, {pipeline_mode = #tpu.pipeline_mode<synchronous>, transform_indices = @transform_2, window_bounds = array<i64: 1, 128>}, {transform_indices = @transform_3, window_bounds = array<i64: 512, 128>}]} {
    %c0 = arith.constant 0 : index
    %c0_0 = arith.constant 0 : index
    %0 = vector.load %arg1[%c0, %c0_0] : memref<512x3xf32, #tpu.memory_space<vmem>>, vector<512x3xf32>
    %c0_1 = arith.constant 0 : index
    %c0_2 = arith.constant 0 : index
    %1 = vector.load %arg2[%c0_1, %c0_2] : memref<3x128xf32, #tpu.memory_space<vmem>>, vector<3x128xf32>
    %2 = vector.extract_strided_slice %0 {offsets = [0, 0], sizes = [512, 1], strides = [1, 1]} : vector<512x3xf32> to vector<512x1xf32>
    %3 = vector.extract_strided_slice %1 {offsets = [0, 0], sizes = [1, 128], strides = [1, 1]} : vector<3x128xf32> to vector<1x128xf32>
    %4 = vector.broadcast %2 : vector<512x1xf32> to vector<512x128xf32>
    %5 = vector.broadcast %3 : vector<1x128xf32> to vector<512x128xf32>
    %6 = arith.mulf %4, %5 : vector<512x128xf32>
    %7 = vector.extract_strided_slice %0 {offsets = [0, 1], sizes = [512, 1], strides = [1, 1]} : vector<512x3xf32> to vector<512x1xf32>
    %8 = vector.extract_strided_slice %1 {offsets = [1, 0], sizes = [1, 128], strides = [1, 1]} : vector<3x128xf32> to vector<1x128xf32>
    %9 = vector.broadcast %7 : vector<512x1xf32> to vector<512x128xf32>
    %10 = vector.broadcast %8 : vector<1x128xf32> to vector<512x128xf32>
    %11 = arith.mulf %9, %10 : vector<512x128xf32>
    %12 = arith.addf %6, %11 : vector<512x128xf32>
    %13 = vector.extract_strided_slice %0 {offsets = [0, 2], sizes = [512, 1], strides = [1, 1]} : vector<512x3xf32> to vector<512x1xf32>
    %14 = vector.extract_strided_slice %1 {offsets = [2, 0], sizes = [1, 128], strides = [1, 1]} : vector<3x128xf32> to vector<1x128xf32>
    %15 = vector.broadcast %13 : vector<512x1xf32> to vector<512x128xf32>
    %16 = vector.broadcast %14 : vector<1x128xf32> to vector<512x128xf32>
    %17 = arith.mulf %15, %16 : vector<512x128xf32>
    %18 = arith.addf %12, %17 : vector<512x128xf32>
    %c0_3 = arith.constant 0 : index
    %c0_4 = arith.constant 0 : index
    %19 = vector.load %arg3[%c0_3, %c0_4] : memref<1x128xf32, #tpu.memory_space<vmem>>, vector<1x128xf32>
    %20 = vector.broadcast %19 : vector<1x128xf32> to vector<512x128xf32>
    %21 = arith.addf %18, %20 : vector<512x128xf32>
    %c0_5 = arith.constant 0 : index
    %c0_6 = arith.constant 0 : index
    %22 = vector.load %arg4[%c0_5, %c0_6] : memref<512x128xf32, #tpu.memory_space<vmem>>, vector<512x128xf32>
    tpu.vector_store %arg4[%c0_5, %c0_6], %21 {strides = array<i32>} : memref<512x128xf32, #tpu.memory_space<vmem>>, vector<512x128xf32>,
    return
  }
  func.func @transform_0(%arg0: i32) -> (i32, i32) {
    %c0_i32 = arith.constant 0 : i32
    %c0_i32_0 = arith.constant 0 : i32
    return %arg0, %c0_i32 : i32, i32
  }
  func.func @transform_1(%arg0: i32) -> (i32, i32) {
    %c0_i32 = arith.constant 0 : i32
    %c0_i32_0 = arith.constant 0 : i32
    %c0_i32_1 = arith.constant 0 : i32
    return %c0_i32, %c0_i32_0 : i32, i32
  }
  func.func @transform_2(%arg0: i32) -> (i32, i32) {
    %c0_i32 = arith.constant 0 : i32
    %c0_i32_0 = arith.constant 0 : i32
    %c0_i32_1 = arith.constant 0 : i32
    return %c0_i32, %c0_i32_0 : i32, i32
  }
  func.func @transform_3(%arg0: i32) -> (i32, i32) {
    %c0_i32 = arith.constant 0 : i32
    %c0_i32_0 = arith.constant 0 : i32
    return %arg0, %c0_i32 : i32, i32
  }
}

</mosaic_0001>

<llo_original>
// kernel: tpu_custom_call.1
$region0: #{tpu_custom_call.1}
  #allocation0 [shape = 'u32[]', space=smem, size = 0x4, offset = 0x4, fixed_abs, tag = 'smem constant byte address 0x4 - core index']
  #allocation1 [shape = 'u32[144,128]{1,0:T(1,128)}', space=vmem, size = 0x12000, scoped, tag = 'internal scratch']
  %s0 = inlined_call_operand.vmem [shape: f32[512,3], index: 0, kind: input, shape index: {}]
  %s1 = inlined_call_operand.vmem [shape: f32[3,128], index: 1, kind: input, shape index: {}]
  %s2 = inlined_call_operand.vmem [shape: f32[1,128], index: 2, kind: input, shape index: {}]
  %s3 = inlined_call_operand.hbm [shape: f32[512,128], index: 3, kind: output, shape index: {}]
  %s4 = sld [smem:[#allocation0]]
  $region22: #{tpu_custom_call.1} parent=0
    _
  %s6 = ssub.s32 1, %s4
  %s7 = scalar_select 0, %s6, %s4
  $region1: #{tpu_custom_call.1} parent=0
    #allocation2 [shape = 'u8[262144]{0}', space=vmem, size = 0x40000, scoped, tag = 'output window, operand 0, single buffered']
    #allocation3 [shape = 's32[1]{0}', space=sflag, size = 0x4, scoped, tag = 'scoped memory for tpu_custom_call.1']
    %8 = vsyncpa [#allocation3], 0
    // Predicated region
    $region2: #{tpu_custom_call.1} parent=1 // pred_check
      _
    $region3: #{tpu_custom_call.1} parent=1 // pred_check_branch
      %10 = sbr.rel (0) target = $region5
    $region4: #{tpu_custom_call.1} parent=1 // pred_region
      _
    $region5: #{tpu_custom_call.1} parent=1 // pred_fallthru
      _
    // Predicated region
    $region6: #{tpu_custom_call.1} parent=1 // pred_check
      _
    $region7: #{tpu_custom_call.1} parent=1 // pred_check_branch
      %12 = sbr.rel (0) target = $region9
    $region8: #{tpu_custom_call.1} parent=1 // pred_region
      _
    $region9: #{tpu_custom_call.1} parent=1 // pred_fallthru
      _
    // Predicated region
    $region10: #{tpu_custom_call.1} parent=1 // pred_check
      _
    $region11: #{tpu_custom_call.1} parent=1 // pred_check_branch
      %14 = sbr.rel (0) target = $region13
    $region12: #{tpu_custom_call.1} parent=1 // pred_region
      _
    $region13: #{tpu_custom_call.1} parent=1 // pred_fallthru
      _
    %v15 = vld [vmem:[%s0] sm:$0xff]
    %v16 = vld [vmem:[%s0 + $0x8] sm:$0xff]
    %v17 = vld [vmem:[%s0 + $0x10] sm:$0xff]
    %v18 = vld [vmem:[%s0 + $0x18] sm:$0xff]
    %v19 = vld [vmem:[%s0 + $0x20] sm:$0xff]
    %v20 = vld [vmem:[%s0 + $0x28] sm:$0xff]
    %v21 = vld [vmem:[%s0 + $0x30] sm:$0xff]
    %v22 = vld [vmem:[%s0 + $0x38] sm:$0xff]
    %v23 = vld [vmem:[%s0 + $0x40] sm:$0xff]
    %v24 = vld [vmem:[%s0 + $0x48] sm:$0xff]
    %v25 = vld [vmem:[%s0 + $0x50] sm:$0xff]
    %v26 = vld [vmem:[%s0 + $0x58] sm:$0xff]
    %v27 = vld [vmem:[%s0 + $0x60] sm:$0xff]
    %v28 = vld [vmem:[%s0 + $0x68] sm:$0xff]
    %v29 = vld [vmem:[%s0 + $0x70] sm:$0xff]
    %v30 = vld [vmem:[%s0 + $0x78] sm:$0xff]
    %v31 = vld [vmem:[%s0 + $0x80] sm:$0xff]
    %v32 = vld [vmem:[%s0 + $0x88] sm:$0xff]
    %v33 = vld [vmem:[%s0 + $0x90] sm:$0xff]
    %v34 = vld [vmem:[%s0 + $0x98] sm:$0xff]
    %v35 = vld [vmem:[%s0 + $0xa0] sm:$0xff]
    %v36 = vld [vmem:[%s0 + $0xa8] sm:$0xff]
    %v37 = vld [vmem:[%s0 + $0xb0] sm:$0xff]
    %v38 = vld [vmem:[%s0 + $0xb8] sm:$0xff]
    %v39 = vld [vmem:[%s0 + $0xc0] sm:$0xff]
    %v40 = vld [vmem:[%s0 + $0xc8] sm:$0xff]
    %v41 = vld [vmem:[%s0 + $0xd0] sm:$0xff]
    %v42 = vld [vmem:[%s0 + $0xd8] sm:$0xff]
    %v43 = vld [vmem:[%s0 + $0xe0] sm:$0xff]
    %v44 = vld [vmem:[%s0 + $0xe8] sm:$0xff]
    %v45 = vld [vmem:[%s0 + $0xf0] sm:$0xff]
    %v46 = vld [vmem:[%s0 + $0xf8] sm:$0xff]
    %v47 = vld [vmem:[%s0 + $0x100] sm:$0xff]
    %v48 = vld [vmem:[%s0 + $0x108] sm:$0xff]
    %v49 = vld [vmem:[%s0 + $0x110] sm:$0xff]
    %v50 = vld [vmem:[%s0 + $0x118] sm:$0xff]
    %v51 = vld [vmem:[%s0 + $0x120] sm:$0xff]
    %v52 = vld [vmem:[%s0 + $0x128] sm:$0xff]
    %v53 = vld [vmem:[%s0 + $0x130] sm:$0xff]
    %v54 = vld [vmem:[%s0 + $0x138] sm:$0xff]
    %v55 = vld [vmem:[%s0 + $0x140] sm:$0xff]
    %v56 = vld [vmem:[%s0 + $0x148] sm:$0xff]
    %v57 = vld [vmem:[%s0 + $0x150] sm:$0xff]
    %v58 = vld [vmem:[%s0 + $0x158] sm:$0xff]
    %v59 = vld [vmem:[%s0 + $0x160] sm:$0xff]
    %v60 = vld [vmem:[%s0 + $0x168] sm:$0xff]
    %v61 = vld [vmem:[%s0 + $0x170] sm:$0xff]
    %v62 = vld [vmem:[%s0 + $0x178] sm:$0xff]
    %v63 = vld [vmem:[%s0 + $0x180] sm:$0xff]
    %v64 = vld [vmem:[%s0 + $0x188] sm:$0xff]
    %v65 = vld [vmem:[%s0 + $0x190] sm:$0xff]
    %v66 = vld [vmem:[%s0 + $0x198] sm:$0xff]
    %v67 = vld [vmem:[%s0 + $0x1a0] sm:$0xff]
    %v68 = vld [vmem:[%s0 + $0x1a8] sm:$0xff]
    %v69 = vld [vmem:[%s0 + $0x1b0] sm:$0xff]
    %v70 = vld [vmem:[%s0 + $0x1b8] sm:$0xff]
    %v71 = vld [vmem:[%s0 + $0x1c0] sm:$0xff]
    %v72 = vld [vmem:[%s0 + $0x1c8] sm:$0xff]
    %v73 = vld [vmem:[%s0 + $0x1d0] sm:$0xff]
    %v74 = vld [vmem:[%s0 + $0x1d8] sm:$0xff]
    %v75 = vld [vmem:[%s0 + $0x1e0] sm:$0xff]
    %v76 = vld [vmem:[%s0 + $0x1e8] sm:$0xff]
    %v77 = vld [vmem:[%s0 + $0x1f0] sm:$0xff]
    %v78 = vld [vmem:[%s0 + $0x1f8] sm:$0xff]
    %v79 = vld [vmem:[%s1] sm:$0x7]
    %81 = vset.pattern.permute.xlu0 0
    %82 = vperm.xlu0 %81, %v15
    %v83 = vpop.permute.xlu0 %82
    %86 = vset.pattern.permute.xlu0 0
    %87 = vperm.xlu0 %86, %v16
    %v88 = vpop.permute.xlu0 %87
    %91 = vset.pattern.permute.xlu0 0
    %92 = vperm.xlu0 %91, %v17
    %v93 = vpop.permute.xlu0 %92
    %96 = vset.pattern.permute.xlu0 0
    %97 = vperm.xlu0 %96, %v18
    %v98 = vpop.permute.xlu0 %97
    %101 = vset.pattern.permute.xlu0 0
    %102 = vperm.xlu0 %101, %v19
    %v103 = vpop.permute.xlu0 %102
    %106 = vset.pattern.permute.xlu0 0
    %107 = vperm.xlu0 %106, %v20
    %v108 = vpop.permute.xlu0 %107
    %111 = vset.pattern.permute.xlu0 0
    %112 = vperm.xlu0 %111, %v21
    %v113 = vpop.permute.xlu0 %112
    %116 = vset.pattern.permute.xlu0 0
    %117 = vperm.xlu0 %116, %v22
    %v118 = vpop.permute.xlu0 %117
    %121 = vset.pattern.permute.xlu0 0
    %122 = vperm.xlu0 %121, %v23
    %v123 = vpop.permute.xlu0 %122
    %126 = vset.pattern.permute.xlu0 0
    %127 = vperm.xlu0 %126, %v24
    %v128 = vpop.permute.xlu0 %127
    %131 = vset.pattern.permute.xlu0 0
    %132 = vperm.xlu0 %131, %v25
    %v133 = vpop.permute.xlu0 %132
    %136 = vset.pattern.permute.xlu0 0
    %137 = vperm.xlu0 %136, %v26
    %v138 = vpop.permute.xlu0 %137
    %141 = vset.pattern.permute.xlu0 0
    %142 = vperm.xlu0 %141, %v27
    %v143 = vpop.permute.xlu0 %142
    %146 = vset.pattern.permute.xlu0 0
    %147 = vperm.xlu0 %146, %v28
    %v148 = vpop.permute.xlu0 %147
    %151 = vset.pattern.permute.xlu0 0
    %152 = vperm.xlu0 %151, %v29
    %v153 = vpop.permute.xlu0 %152
    %156 = vset.pattern.permute.xlu0 0
    %157 = vperm.xlu0 %156, %v30
    %v158 = vpop.permute.xlu0 %157
    %161 = vset.pattern.permute.xlu0 0
    %162 = vperm.xlu0 %161, %v31
    %v163 = vpop.permute.xlu0 %162
    %166 = vset.pattern.permute.xlu0 0
    %167 = vperm.xlu0 %166, %v32
    %v168 = vpop.permute.xlu0 %167
    %171 = vset.pattern.permute.xlu0 0
    %172 = vperm.xlu0 %171, %v33
    %v173 = vpop.permute.xlu0 %172
    %176 = vset.pattern.permute.xlu0 0
    %177 = vperm.xlu0 %176, %v34
    %v178 = vpop.permute.xlu0 %177
    %181 = vset.pattern.permute.xlu0 0
    %182 = vperm.xlu0 %181, %v35
    %v183 = vpop.permute.xlu0 %182
    %186 = vset.pattern.permute.xlu0 0
    %187 = vperm.xlu0 %186, %v36
    %v188 = vpop.permute.xlu0 %187
    %191 = vset.pattern.permute.xlu0 0
    %192 = vperm.xlu0 %191, %v37
    %v193 = vpop.permute.xlu0 %192
    %196 = vset.pattern.permute.xlu0 0
    %197 = vperm.xlu0 %196, %v38
    %v198 = vpop.permute.xlu0 %197
    %201 = vset.pattern.permute.xlu0 0
    %202 = vperm.xlu0 %201, %v39
    %v203 = vpop.permute.xlu0 %202
    %206 = vset.pattern.permute.xlu0 0
    %207 = vperm.xlu0 %206, %v40
    %v208 = vpop.permute.xlu0 %207
    %211 = vset.pattern.permute.xlu0 0
    %212 = vperm.xlu0 %211, %v41
    %v213 = vpop.permute.xlu0 %212
    %216 = vset.pattern.permute.xlu0 0
    %217 = vperm.xlu0 %216, %v42
    %v218 = vpop.permute.xlu0 %217
    %221 = vset.pattern.permute.xlu0 0
    %222 = vperm.xlu0 %221, %v43
    %v223 = vpop.permute.xlu0 %222
    %226 = vset.pattern.permute.xlu0 0
    %227 = vperm.xlu0 %226, %v44
    %v228 = vpop.permute.xlu0 %227
    %231 = vset.pattern.permute.xlu0 0
    %232 = vperm.xlu0 %231, %v45
    %v233 = vpop.permute.xlu0 %232
    %236 = vset.pattern.permute.xlu0 0
    %237 = vperm.xlu0 %236, %v46
    %v238 = vpop.permute.xlu0 %237
    %241 = vset.pattern.permute.xlu0 0
    %242 = vperm.xlu0 %241, %v47
    %v243 = vpop.permute.xlu0 %242
    %246 = vset.pattern.permute.xlu0 0
    %247 = vperm.xlu0 %246, %v48
    %v248 = vpop.permute.xlu0 %247
    %251 = vset.pattern.permute.xlu0 0
    %252 = vperm.xlu0 %251, %v49
    %v253 = vpop.permute.xlu0 %252
    %256 = vset.pattern.permute.xlu0 0
    %257 = vperm.xlu0 %256, %v50
    %v258 = vpop.permute.xlu0 %257
    %261 = vset.pattern.permute.xlu0 0
    %262 = vperm.xlu0 %261, %v51
    %v263 = vpop.permute.xlu0 %262
    %266 = vset.pattern.permute.xlu0 0
    %267 = vperm.xlu0 %266, %v52
    %v268 = vpop.permute.xlu0 %267
    %271 = vset.pattern.permute.xlu0 0
    %272 = vperm.xlu0 %271, %v53
    %v273 = vpop.permute.xlu0 %272
    %276 = vset.pattern.permute.xlu0 0
    %277 = vperm.xlu0 %276, %v54
    %v278 = vpop.permute.xlu0 %277
    %281 = vset.pattern.permute.xlu0 0
    %282 = vperm.xlu0 %281, %v55
    %v283 = vpop.permute.xlu0 %282
    %286 = vset.pattern.permute.xlu0 0
    %287 = vperm.xlu0 %286, %v56
    %v288 = vpop.permute.xlu0 %287
    %291 = vset.pattern.permute.xlu0 0
    %292 = vperm.xlu0 %291, %v57
    %v293 = vpop.permute.xlu0 %292
    %296 = vset.pattern.permute.xlu0 0
    %297 = vperm.xlu0 %296, %v58
    %v298 = vpop.permute.xlu0 %297
    %301 = vset.pattern.permute.xlu0 0
    %302 = vperm.xlu0 %301, %v59
    %v303 = vpop.permute.xlu0 %302
    %306 = vset.pattern.permute.xlu0 0
    %307 = vperm.xlu0 %306, %v60
    %v308 = vpop.permute.xlu0 %307
    %311 = vset.pattern.permute.xlu0 0
    %312 = vperm.xlu0 %311, %v61
    %v313 = vpop.permute.xlu0 %312
    %316 = vset.pattern.permute.xlu0 0
    %317 = vperm.xlu0 %316, %v62
    %v318 = vpop.permute.xlu0 %317
    %321 = vset.pattern.permute.xlu0 0
    %322 = vperm.xlu0 %321, %v63
    %v323 = vpop.permute.xlu0 %322
    %326 = vset.pattern.permute.xlu0 0
    %327 = vperm.xlu0 %326, %v64
    %v328 = vpop.permute.xlu0 %327
    %331 = vset.pattern.permute.xlu0 0
    %332 = vperm.xlu0 %331, %v65
    %v333 = vpop.permute.xlu0 %332
    %336 = vset.pattern.permute.xlu0 0
    %337 = vperm.xlu0 %336, %v66
    %v338 = vpop.permute.xlu0 %337
    %341 = vset.pattern.permute.xlu0 0
    %342 = vperm.xlu0 %341, %v67
    %v343 = vpop.permute.xlu0 %342
    %346 = vset.pattern.permute.xlu0 0
    %347 = vperm.xlu0 %346, %v68
    %v348 = vpop.permute.xlu0 %347
    %351 = vset.pattern.permute.xlu0 0
    %352 = vperm.xlu0 %351, %v69
    %v353 = vpop.permute.xlu0 %352
    %356 = vset.pattern.permute.xlu0 0
    %357 = vperm.xlu0 %356, %v70
    %v358 = vpop.permute.xlu0 %357
    %361 = vset.pattern.permute.xlu0 0
    %362 = vperm.xlu0 %361, %v71
    %v363 = vpop.permute.xlu0 %362
    %366 = vset.pattern.permute.xlu0 0
    %367 = vperm.xlu0 %366, %v72
    %v368 = vpop.permute.xlu0 %367
    %371 = vset.pattern.permute.xlu0 0
    %372 = vperm.xlu0 %371, %v73
    %v373 = vpop.permute.xlu0 %372
    %376 = vset.pattern.permute.xlu0 0
    %377 = vperm.xlu0 %376, %v74
    %v378 = vpop.permute.xlu0 %377
    %381 = vset.pattern.permute.xlu0 0
    %382 = vperm.xlu0 %381, %v75
    %v383 = vpop.permute.xlu0 %382
    %386 = vset.pattern.permute.xlu0 0
    %387 = vperm.xlu0 %386, %v76
    %v388 = vpop.permute.xlu0 %387
    %391 = vset.pattern.permute.xlu0 0
    %392 = vperm.xlu0 %391, %v77
    %v393 = vpop.permute.xlu0 %392
    %396 = vset.pattern.permute.xlu0 0
    %397 = vperm.xlu0 %396, %v78
    %v398 = vpop.permute.xlu0 %397
    %v400 = vlaneseq
    %v401 = vshrl.u32 %v400, 7
    %v402 = vsub.s32 0, %v401
    %v403 = vrot.slane %v79, %v402
    %v404 = vmul.f32 %v83, %v403
    %v405 = vmul.f32 %v88, %v403
    %v406 = vmul.f32 %v93, %v403
    %v407 = vmul.f32 %v98, %v403
    %v408 = vmul.f32 %v103, %v403
    %v409 = vmul.f32 %v108, %v403
    %v410 = vmul.f32 %v113, %v403
    %v411 = vmul.f32 %v118, %v403
    %v412 = vmul.f32 %v123, %v403
    %v413 = vmul.f32 %v128, %v403
    %v414 = vmul.f32 %v133, %v403
    %v415 = vmul.f32 %v138, %v403
    %v416 = vmul.f32 %v143, %v403
    %v417 = vmul.f32 %v148, %v403
    %v418 = vmul.f32 %v153, %v403
    %v419 = vmul.f32 %v158, %v403
    %v420 = vmul.f32 %v163, %v403
    %v421 = vmul.f32 %v168, %v403
    %v422 = vmul.f32 %v173, %v403
    %v423 = vmul.f32 %v178, %v403
    %v424 = vmul.f32 %v183, %v403
    %v425 = vmul.f32 %v188, %v403
    %v426 = vmul.f32 %v193, %v403
    %v427 = vmul.f32 %v198, %v403
    %v428 = vmul.f32 %v203, %v403
    %v429 = vmul.f32 %v208, %v403
    %v430 = vmul.f32 %v213, %v403
    %v431 = vmul.f32 %v218, %v403
    %v432 = vmul.f32 %v223, %v403
    %v433 = vmul.f32 %v228, %v403
    %v434 = vmul.f32 %v233, %v403
    %v435 = vmul.f32 %v238, %v403
    %v436 = vmul.f32 %v243, %v403
    %v437 = vmul.f32 %v248, %v403
    %v438 = vmul.f32 %v253, %v403
    %v439 = vmul.f32 %v258, %v403
    %v440 = vmul.f32 %v263, %v403
    %v441 = vmul.f32 %v268, %v403
    %v442 = vmul.f32 %v273, %v403
    %v443 = vmul.f32 %v278, %v403
    %v444 = vmul.f32 %v283, %v403
    %v445 = vmul.f32 %v288, %v403
    %v446 = vmul.f32 %v293, %v403
    %v447 = vmul.f32 %v298, %v403
    %v448 = vmul.f32 %v303, %v403
    %v449 = vmul.f32 %v308, %v403
    %v450 = vmul.f32 %v313, %v403
    %v451 = vmul.f32 %v318, %v403
    %v452 = vmul.f32 %v323, %v403
    %v453 = vmul.f32 %v328, %v403
    %v454 = vmul.f32 %v333, %v403
    %v455 = vmul.f32 %v338, %v403
    %v456 = vmul.f32 %v343, %v403
    %v457 = vmul.f32 %v348, %v403
    %v458 = vmul.f32 %v353, %v403
    %v459 = vmul.f32 %v358, %v403
    %v460 = vmul.f32 %v363, %v403
    %v461 = vmul.f32 %v368, %v403
    %v462 = vmul.f32 %v373, %v403
    %v463 = vmul.f32 %v378, %v403
    %v464 = vmul.f32 %v383, %v403
    %v465 = vmul.f32 %v388, %v403
    %v466 = vmul.f32 %v393, %v403
    %v467 = vmul.f32 %v398, %v403
    %468 = vset.pattern.permute.xlu0 1
    %469 = vperm.xlu0 %468, %v15
    %v470 = vpop.permute.xlu0 %469
    %472 = vset.pattern.permute.xlu0 1
    %473 = vperm.xlu0 %472, %v16
    %v474 = vpop.permute.xlu0 %473
    %476 = vset.pattern.permute.xlu0 1
    %477 = vperm.xlu0 %476, %v17
    %v478 = vpop.permute.xlu0 %477
    %480 = vset.pattern.permute.xlu0 1
    %481 = vperm.xlu0 %480, %v18
    %v482 = vpop.permute.xlu0 %481
    %484 = vset.pattern.permute.xlu0 1
    %485 = vperm.xlu0 %484, %v19
    %v486 = vpop.permute.xlu0 %485
    %488 = vset.pattern.permute.xlu0 1
    %489 = vperm.xlu0 %488, %v20
    %v490 = vpop.permute.xlu0 %489
    %492 = vset.pattern.permute.xlu0 1
    %493 = vperm.xlu0 %492, %v21
    %v494 = vpop.permute.xlu0 %493
    %496 = vset.pattern.permute.xlu0 1
    %497 = vperm.xlu0 %496, %v22
    %v498 = vpop.permute.xlu0 %497
    %500 = vset.pattern.permute.xlu0 1
    %501 = vperm.xlu0 %500, %v23
    %v502 = vpop.permute.xlu0 %501
    %504 = vset.pattern.permute.xlu0 1
    %505 = vperm.xlu0 %504, %v24
    %v506 = vpop.permute.xlu0 %505
    %508 = vset.pattern.permute.xlu0 1
    %509 = vperm.xlu0 %508, %v25
    %v510 = vpop.permute.xlu0 %509
    %512 = vset.pattern.permute.xlu0 1
    %513 = vperm.xlu0 %512, %v26
    %v514 = vpop.permute.xlu0 %513
    %516 = vset.pattern.permute.xlu0 1
    %517 = vperm.xlu0 %516, %v27
    %v518 = vpop.permute.xlu0 %517
    %520 = vset.pattern.permute.xlu0 1
    %521 = vperm.xlu0 %520, %v28
    %v522 = vpop.permute.xlu0 %521
    %524 = vset.pattern.permute.xlu0 1
    %525 = vperm.xlu0 %524, %v29
    %v526 = vpop.permute.xlu0 %525
    %528 = vset.pattern.permute.xlu0 1
    %529 = vperm.xlu0 %528, %v30
    %v530 = vpop.permute.xlu0 %529
    %532 = vset.pattern.permute.xlu0 1
    %533 = vperm.xlu0 %532, %v31
    %v534 = vpop.permute.xlu0 %533
    %536 = vset.pattern.permute.xlu0 1
    %537 = vperm.xlu0 %536, %v32
    %v538 = vpop.permute.xlu0 %537
    %540 = vset.pattern.permute.xlu0 1
    %541 = vperm.xlu0 %540, %v33
    %v542 = vpop.permute.xlu0 %541
    %544 = vset.pattern.permute.xlu0 1
    %545 = vperm.xlu0 %544, %v34
    %v546 = vpop.permute.xlu0 %545
    %548 = vset.pattern.permute.xlu0 1
    %549 = vperm.xlu0 %548, %v35
    %v550 = vpop.permute.xlu0 %549
    %552 = vset.pattern.permute.xlu0 1
    %553 = vperm.xlu0 %552, %v36
    %v554 = vpop.permute.xlu0 %553
    %556 = vset.pattern.permute.xlu0 1
    %557 = vperm.xlu0 %556, %v37
    %v558 = vpop.permute.xlu0 %557
    %560 = vset.pattern.permute.xlu0 1
    %561 = vperm.xlu0 %560, %v38
    %v562 = vpop.permute.xlu0 %561
    %564 = vset.pattern.permute.xlu0 1
    %565 = vperm.xlu0 %564, %v39
    %v566 = vpop.permute.xlu0 %565
    %568 = vset.pattern.permute.xlu0 1
    %569 = vperm.xlu0 %568, %v40
    %v570 = vpop.permute.xlu0 %569
    %572 = vset.pattern.permute.xlu0 1
    %573 = vperm.xlu0 %572, %v41
    %v574 = vpop.permute.xlu0 %573
    %576 = vset.pattern.permute.xlu0 1
    %577 = vperm.xlu0 %576, %v42
    %v578 = vpop.permute.xlu0 %577
    %580 = vset.pattern.permute.xlu0 1
    %581 = vperm.xlu0 %580, %v43
    %v582 = vpop.permute.xlu0 %581
    %584 = vset.pattern.permute.xlu0 1
    %585 = vperm.xlu0 %584, %v44
    %v586 = vpop.permute.xlu0 %585
    %588 = vset.pattern.permute.xlu0 1
    %589 = vperm.xlu0 %588, %v45
    %v590 = vpop.permute.xlu0 %589
    %592 = vset.pattern.permute.xlu0 1
    %593 = vperm.xlu0 %592, %v46
    %v594 = vpop.permute.xlu0 %593
    %596 = vset.pattern.permute.xlu0 1
    %597 = vperm.xlu0 %596, %v47
    %v598 = vpop.permute.xlu0 %597
    %600 = vset.pattern.permute.xlu0 1
    %601 = vperm.xlu0 %600, %v48
    %v602 = vpop.permute.xlu0 %601
    %604 = vset.pattern.permute.xlu0 1
    %605 = vperm.xlu0 %604, %v49
    %v606 = vpop.permute.xlu0 %605
    %608 = vset.pattern.permute.xlu0 1
    %609 = vperm.xlu0 %608, %v50
    %v610 = vpop.permute.xlu0 %609
    %612 = vset.pattern.permute.xlu0 1
    %613 = vperm.xlu0 %612, %v51
    %v614 = vpop.permute.xlu0 %613
    %616 = vset.pattern.permute.xlu0 1
    %617 = vperm.xlu0 %616, %v52
    %v618 = vpop.permute.xlu0 %617
    %620 = vset.pattern.permute.xlu0 1
    %621 = vperm.xlu0 %620, %v53
    %v622 = vpop.permute.xlu0 %621
    %624 = vset.pattern.permute.xlu0 1
    %625 = vperm.xlu0 %624, %v54
    %v626 = vpop.permute.xlu0 %625
    %628 = vset.pattern.permute.xlu0 1
    %629 = vperm.xlu0 %628, %v55
    %v630 = vpop.permute.xlu0 %629
    %632 = vset.pattern.permute.xlu0 1
    %633 = vperm.xlu0 %632, %v56
    %v634 = vpop.permute.xlu0 %633
    %636 = vset.pattern.permute.xlu0 1
    %637 = vperm.xlu0 %636, %v57
    %v638 = vpop.permute.xlu0 %637
    %640 = vset.pattern.permute.xlu0 1
    %641 = vperm.xlu0 %640, %v58
    %v642 = vpop.permute.xlu0 %641
    %644 = vset.pattern.permute.xlu0 1
    %645 = vperm.xlu0 %644, %v59
    %v646 = vpop.permute.xlu0 %645
    %648 = vset.pattern.permute.xlu0 1
    %649 = vperm.xlu0 %648, %v60
    %v650 = vpop.permute.xlu0 %649
    %652 = vset.pattern.permute.xlu0 1
    %653 = vperm.xlu0 %652, %v61
    %v654 = vpop.permute.xlu0 %653
    %656 = vset.pattern.permute.xlu0 1
    %657 = vperm.xlu0 %656, %v62
    %v658 = vpop.permute.xlu0 %657
    %660 = vset.pattern.permute.xlu0 1
    %661 = vperm.xlu0 %660, %v63
    %v662 = vpop.permute.xlu0 %661
    %664 = vset.pattern.permute.xlu0 1
    %665 = vperm.xlu0 %664, %v64
    %v666 = vpop.permute.xlu0 %665
    %668 = vset.pattern.permute.xlu0 1
    %669 = vperm.xlu0 %668, %v65
    %v670 = vpop.permute.xlu0 %669
    %672 = vset.pattern.permute.xlu0 1
    %673 = vperm.xlu0 %672, %v66
    %v674 = vpop.permute.xlu0 %673
    %676 = vset.pattern.permute.xlu0 1
    %677 = vperm.xlu0 %676, %v67
    %v678 = vpop.permute.xlu0 %677
    %680 = vset.pattern.permute.xlu0 1
    %681 = vperm.xlu0 %680, %v68
    %v682 = vpop.permute.xlu0 %681
    %684 = vset.pattern.permute.xlu0 1
    %685 = vperm.xlu0 %684, %v69
    %v686 = vpop.permute.xlu0 %685
    %688 = vset.pattern.permute.xlu0 1
    %689 = vperm.xlu0 %688, %v70
    %v690 = vpop.permute.xlu0 %689
    %692 = vset.pattern.permute.xlu0 1
    %693 = vperm.xlu0 %692, %v71
    %v694 = vpop.permute.xlu0 %693
    %696 = vset.pattern.permute.xlu0 1
    %697 = vperm.xlu0 %696, %v72
    %v698 = vpop.permute.xlu0 %697
    %700 = vset.pattern.permute.xlu0 1
    %701 = vperm.xlu0 %700, %v73
    %v702 = vpop.permute.xlu0 %701
    %704 = vset.pattern.permute.xlu0 1
    %705 = vperm.xlu0 %704, %v74
    %v706 = vpop.permute.xlu0 %705
    %708 = vset.pattern.permute.xlu0 1
    %709 = vperm.xlu0 %708, %v75
    %v710 = vpop.permute.xlu0 %709
    %712 = vset.pattern.permute.xlu0 1
    %713 = vperm.xlu0 %712, %v76
    %v714 = vpop.permute.xlu0 %713
    %716 = vset.pattern.permute.xlu0 1
    %717 = vperm.xlu0 %716, %v77
    %v718 = vpop.permute.xlu0 %717
    %720 = vset.pattern.permute.xlu0 1
    %721 = vperm.xlu0 %720, %v78
    %v722 = vpop.permute.xlu0 %721
    %v724 = vlaneseq
    %v725 = vshrl.u32 %v724, 7
    %v726 = vsub.s32 1, %v725
    %v727 = vrot.slane %v79, %v726
    %v728 = vmul.f32 %v470, %v727
    %v729 = vmul.f32 %v474, %v727
    %v730 = vmul.f32 %v478, %v727
    %v731 = vmul.f32 %v482, %v727
    %v732 = vmul.f32 %v486, %v727
    %v733 = vmul.f32 %v490, %v727
    %v734 = vmul.f32 %v494, %v727
    %v735 = vmul.f32 %v498, %v727
    %v736 = vmul.f32 %v502, %v727
    %v737 = vmul.f32 %v506, %v727
    %v738 = vmul.f32 %v510, %v727
    %v739 = vmul.f32 %v514, %v727
    %v740 = vmul.f32 %v518, %v727
    %v741 = vmul.f32 %v522, %v727
    %v742 = vmul.f32 %v526, %v727
    %v743 = vmul.f32 %v530, %v727
    %v744 = vmul.f32 %v534, %v727
    %v745 = vmul.f32 %v538, %v727
    %v746 = vmul.f32 %v542, %v727
    %v747 = vmul.f32 %v546, %v727
    %v748 = vmul.f32 %v550, %v727
    %v749 = vmul.f32 %v554, %v727
    %v750 = vmul.f32 %v558, %v727
    %v751 = vmul.f32 %v562, %v727
    %v752 = vmul.f32 %v566, %v727
    %v753 = vmul.f32 %v570, %v727
    %v754 = vmul.f32 %v574, %v727
    %v755 = vmul.f32 %v578, %v727
    %v756 = vmul.f32 %v582, %v727
    %v757 = vmul.f32 %v586, %v727
    %v758 = vmul.f32 %v590, %v727
    %v759 = vmul.f32 %v594, %v727
    %v760 = vmul.f32 %v598, %v727
    %v761 = vmul.f32 %v602, %v727
    %v762 = vmul.f32 %v606, %v727
    %v763 = vmul.f32 %v610, %v727
    %v764 = vmul.f32 %v614, %v727
    %v765 = vmul.f32 %v618, %v727
    %v766 = vmul.f32 %v622, %v727
    %v767 = vmul.f32 %v626, %v727
    %v768 = vmul.f32 %v630, %v727
    %v769 = vmul.f32 %v634, %v727
    %v770 = vmul.f32 %v638, %v727
    %v771 = vmul.f32 %v642, %v727
    %v772 = vmul.f32 %v646, %v727
    %v773 = vmul.f32 %v650, %v727
    %v774 = vmul.f32 %v654, %v727
    %v775 = vmul.f32 %v658, %v727
    %v776 = vmul.f32 %v662, %v727
    %v777 = vmul.f32 %v666, %v727
    %v778 = vmul.f32 %v670, %v727
    %v779 = vmul.f32 %v674, %v727
    %v780 = vmul.f32 %v678, %v727
    %v781 = vmul.f32 %v682, %v727
    %v782 = vmul.f32 %v686, %v727
    %v783 = vmul.f32 %v690, %v727
    %v784 = vmul.f32 %v694, %v727
    %v785 = vmul.f32 %v698, %v727
    %v786 = vmul.f32 %v702, %v727
    %v787 = vmul.f32 %v706, %v727
    %v788 = vmul.f32 %v710, %v727
    %v789 = vmul.f32 %v714, %v727
    %v790 = vmul.f32 %v718, %v727
    %v791 = vmul.f32 %v722, %v727
    %v792 = vadd.f32 %v404, %v728
    %v793 = vadd.f32 %v405, %v729
    %v794 = vadd.f32 %v406, %v730
    %v795 = vadd.f32 %v407, %v731
    %v796 = vadd.f32 %v408, %v732
    %v797 = vadd.f32 %v409, %v733
    %v798 = vadd.f32 %v410, %v734
    %v799 = vadd.f32 %v411, %v735
    %v800 = vadd.f32 %v412, %v736
    %v801 = vadd.f32 %v413, %v737
    %v802 = vadd.f32 %v414, %v738
    %v803 = vadd.f32 %v415, %v739
    %v804 = vadd.f32 %v416, %v740
    %v805 = vadd.f32 %v417, %v741
    %v806 = vadd.f32 %v418, %v742
    %v807 = vadd.f32 %v419, %v743
    %v808 = vadd.f32 %v420, %v744
    %v809 = vadd.f32 %v421, %v745
    %v810 = vadd.f32 %v422, %v746
    %v811 = vadd.f32 %v423, %v747
    %v812 = vadd.f32 %v424, %v748
    %v813 = vadd.f32 %v425, %v749
    %v814 = vadd.f32 %v426, %v750
    %v815 = vadd.f32 %v427, %v751
    %v816 = vadd.f32 %v428, %v752
    %v817 = vadd.f32 %v429, %v753
    %v818 = vadd.f32 %v430, %v754
    %v819 = vadd.f32 %v431, %v755
    %v820 = vadd.f32 %v432, %v756
    %v821 = vadd.f32 %v433, %v757
    %v822 = vadd.f32 %v434, %v758
    %v823 = vadd.f32 %v435, %v759
    %v824 = vadd.f32 %v436, %v760
    %v825 = vadd.f32 %v437, %v761
    %v826 = vadd.f32 %v438, %v762
    %v827 = vadd.f32 %v439, %v763
    %v828 = vadd.f32 %v440, %v764
    %v829 = vadd.f32 %v441, %v765
    %v830 = vadd.f32 %v442, %v766
    %v831 = vadd.f32 %v443, %v767
    %v832 = vadd.f32 %v444, %v768
    %v833 = vadd.f32 %v445, %v769
    %v834 = vadd.f32 %v446, %v770
    %v835 = vadd.f32 %v447, %v771
    %v836 = vadd.f32 %v448, %v772
    %v837 = vadd.f32 %v449, %v773
    %v838 = vadd.f32 %v450, %v774
    %v839 = vadd.f32 %v451, %v775
    %v840 = vadd.f32 %v452, %v776
    %v841 = vadd.f32 %v453, %v777
    %v842 = vadd.f32 %v454, %v778
    %v843 = vadd.f32 %v455, %v779
    %v844 = vadd.f32 %v456, %v780
    %v845 = vadd.f32 %v457, %v781
    %v846 = vadd.f32 %v458, %v782
    %v847 = vadd.f32 %v459, %v783
    %v848 = vadd.f32 %v460, %v784
    %v849 = vadd.f32 %v461, %v785
    %v850 = vadd.f32 %v462, %v786
    %v851 = vadd.f32 %v463, %v787
    %v852 = vadd.f32 %v464, %v788
    %v853 = vadd.f32 %v465, %v789
    %v854 = vadd.f32 %v466, %v790
    %v855 = vadd.f32 %v467, %v791
    %856 = vset.pattern.permute.xlu0 2
    %857 = vperm.xlu0 %856, %v15
    %v858 = vpop.permute.xlu0 %857
    %860 = vset.pattern.permute.xlu0 2
    %861 = vperm.xlu0 %860, %v16
    %v862 = vpop.permute.xlu0 %861
    %864 = vset.pattern.permute.xlu0 2
    %865 = vperm.xlu0 %864, %v17
    %v866 = vpop.permute.xlu0 %865
    %868 = vset.pattern.permute.xlu0 2
    %869 = vperm.xlu0 %868, %v18
    %v870 = vpop.permute.xlu0 %869
    %872 = vset.pattern.permute.xlu0 2
    %873 = vperm.xlu0 %872, %v19
    %v874 = vpop.permute.xlu0 %873
    %876 = vset.pattern.permute.xlu0 2
    %877 = vperm.xlu0 %876, %v20
    %v878 = vpop.permute.xlu0 %877
    %880 = vset.pattern.permute.xlu0 2
    %881 = vperm.xlu0 %880, %v21
    %v882 = vpop.permute.xlu0 %881
    %884 = vset.pattern.permute.xlu0 2
    %885 = vperm.xlu0 %884, %v22
    %v886 = vpop.permute.xlu0 %885
    %888 = vset.pattern.permute.xlu0 2
    %889 = vperm.xlu0 %888, %v23
    %v890 = vpop.permute.xlu0 %889
    %892 = vset.pattern.permute.xlu0 2
    %893 = vperm.xlu0 %892, %v24
    %v894 = vpop.permute.xlu0 %893
    %896 = vset.pattern.permute.xlu0 2
    %897 = vperm.xlu0 %896, %v25
    %v898 = vpop.permute.xlu0 %897
    %900 = vset.pattern.permute.xlu0 2
    %901 = vperm.xlu0 %900, %v26
    %v902 = vpop.permute.xlu0 %901
    %904 = vset.pattern.permute.xlu0 2
    %905 = vperm.xlu0 %904, %v27
    %v906 = vpop.permute.xlu0 %905
    %908 = vset.pattern.permute.xlu0 2
    %909 = vperm.xlu0 %908, %v28
    %v910 = vpop.permute.xlu0 %909
    %912 = vset.pattern.permute.xlu0 2
    %913 = vperm.xlu0 %912, %v29
    %v914 = vpop.permute.xlu0 %913
    %916 = vset.pattern.permute.xlu0 2
    %917 = vperm.xlu0 %916, %v30
    %v918 = vpop.permute.xlu0 %917
    %920 = vset.pattern.permute.xlu0 2
    %921 = vperm.xlu0 %920, %v31
    %v922 = vpop.permute.xlu0 %921
    %924 = vset.pattern.permute.xlu0 2
    %925 = vperm.xlu0 %924, %v32
    %v926 = vpop.permute.xlu0 %925
    %928 = vset.pattern.permute.xlu0 2
    %929 = vperm.xlu0 %928, %v33
    %v930 = vpop.permute.xlu0 %929
    %932 = vset.pattern.permute.xlu0 2
    %933 = vperm.xlu0 %932, %v34
    %v934 = vpop.permute.xlu0 %933
    %936 = vset.pattern.permute.xlu0 2
    %937 = vperm.xlu0 %936, %v35
    %v938 = vpop.permute.xlu0 %937
    %940 = vset.pattern.permute.xlu0 2
    %941 = vperm.xlu0 %940, %v36
    %v942 = vpop.permute.xlu0 %941
    %944 = vset.pattern.permute.xlu0 2
    %945 = vperm.xlu0 %944, %v37
    %v946 = vpop.permute.xlu0 %945
    %948 = vset.pattern.permute.xlu0 2
    %949 = vperm.xlu0 %948, %v38
    %v950 = vpop.permute.xlu0 %949
    %952 = vset.pattern.permute.xlu0 2
    %953 = vperm.xlu0 %952, %v39
    %v954 = vpop.permute.xlu0 %953
    %956 = vset.pattern.permute.xlu0 2
    %957 = vperm.xlu0 %956, %v40
    %v958 = vpop.permute.xlu0 %957
    %960 = vset.pattern.permute.xlu0 2
    %961 = vperm.xlu0 %960, %v41
    %v962 = vpop.permute.xlu0 %961
    %964 = vset.pattern.permute.xlu0 2
    %965 = vperm.xlu0 %964, %v42
    %v966 = vpop.permute.xlu0 %965
    %968 = vset.pattern.permute.xlu0 2
    %969 = vperm.xlu0 %968, %v43
    %v970 = vpop.permute.xlu0 %969
    %972 = vset.pattern.permute.xlu0 2
    %973 = vperm.xlu0 %972, %v44
    %v974 = vpop.permute.xlu0 %973
    %976 = vset.pattern.permute.xlu0 2
    %977 = vperm.xlu0 %976, %v45
    %v978 = vpop.permute.xlu0 %977
    %980 = vset.pattern.permute.xlu0 2
    %981 = vperm.xlu0 %980, %v46
    %v982 = vpop.permute.xlu0 %981
    %984 = vset.pattern.permute.xlu0 2
    %985 = vperm.xlu0 %984, %v47
    %v986 = vpop.permute.xlu0 %985
    %988 = vset.pattern.permute.xlu0 2
    %989 = vperm.xlu0 %988, %v48
    %v990 = vpop.permute.xlu0 %989
    %992 = vset.pattern.permute.xlu0 2
    %993 = vperm.xlu0 %992, %v49
    %v994 = vpop.permute.xlu0 %993
    %996 = vset.pattern.permute.xlu0 2
    %997 = vperm.xlu0 %996, %v50
    %v998 = vpop.permute.xlu0 %997
    %1000 = vset.pattern.permute.xlu0 2
    %1001 = vperm.xlu0 %1000, %v51
    %v1002 = vpop.permute.xlu0 %1001
    %1004 = vset.pattern.permute.xlu0 2
    %1005 = vperm.xlu0 %1004, %v52
    %v1006 = vpop.permute.xlu0 %1005
    %1008 = vset.pattern.permute.xlu0 2
    %1009 = vperm.xlu0 %1008, %v53
    %v1010 = vpop.permute.xlu0 %1009
    %1012 = vset.pattern.permute.xlu0 2
    %1013 = vperm.xlu0 %1012, %v54
    %v1014 = vpop.permute.xlu0 %1013
    %1016 = vset.pattern.permute.xlu0 2
    %1017 = vperm.xlu0 %1016, %v55
    %v1018 = vpop.permute.xlu0 %1017
    %1020 = vset.pattern.permute.xlu0 2
    %1021 = vperm.xlu0 %1020, %v56
    %v1022 = vpop.permute.xlu0 %1021
    %1024 = vset.pattern.permute.xlu0 2
    %1025 = vperm.xlu0 %1024, %v57
    %v1026 = vpop.permute.xlu0 %1025
    %1028 = vset.pattern.permute.xlu0 2
    %1029 = vperm.xlu0 %1028, %v58
    %v1030 = vpop.permute.xlu0 %1029
    %1032 = vset.pattern.permute.xlu0 2
    %1033 = vperm.xlu0 %1032, %v59
    %v1034 = vpop.permute.xlu0 %1033
    %1036 = vset.pattern.permute.xlu0 2
    %1037 = vperm.xlu0 %1036, %v60
    %v1038 = vpop.permute.xlu0 %1037
    %1040 = vset.pattern.permute.xlu0 2
    %1041 = vperm.xlu0 %1040, %v61
    %v1042 = vpop.permute.xlu0 %1041
    %1044 = vset.pattern.permute.xlu0 2
    %1045 = vperm.xlu0 %1044, %v62
    %v1046 = vpop.permute.xlu0 %1045
    %1048 = vset.pattern.permute.xlu0 2
    %1049 = vperm.xlu0 %1048, %v63
    %v1050 = vpop.permute.xlu0 %1049
    %1052 = vset.pattern.permute.xlu0 2
    %1053 = vperm.xlu0 %1052, %v64
    %v1054 = vpop.permute.xlu0 %1053
    %1056 = vset.pattern.permute.xlu0 2
    %1057 = vperm.xlu0 %1056, %v65
    %v1058 = vpop.permute.xlu0 %1057
    %1060 = vset.pattern.permute.xlu0 2
    %1061 = vperm.xlu0 %1060, %v66
    %v1062 = vpop.permute.xlu0 %1061
    %1064 = vset.pattern.permute.xlu0 2
    %1065 = vperm.xlu0 %1064, %v67
    %v1066 = vpop.permute.xlu0 %1065
    %1068 = vset.pattern.permute.xlu0 2
    %1069 = vperm.xlu0 %1068, %v68
    %v1070 = vpop.permute.xlu0 %1069
    %1072 = vset.pattern.permute.xlu0 2
    %1073 = vperm.xlu0 %1072, %v69
    %v1074 = vpop.permute.xlu0 %1073
    %1076 = vset.pattern.permute.xlu0 2
    %1077 = vperm.xlu0 %1076, %v70
    %v1078 = vpop.permute.xlu0 %1077
    %1080 = vset.pattern.permute.xlu0 2
    %1081 = vperm.xlu0 %1080, %v71
    %v1082 = vpop.permute.xlu0 %1081
    %1084 = vset.pattern.permute.xlu0 2
    %1085 = vperm.xlu0 %1084, %v72
    %v1086 = vpop.permute.xlu0 %1085
    %1088 = vset.pattern.permute.xlu0 2
    %1089 = vperm.xlu0 %1088, %v73
    %v1090 = vpop.permute.xlu0 %1089
    %1092 = vset.pattern.permute.xlu0 2
    %1093 = vperm.xlu0 %1092, %v74
    %v1094 = vpop.permute.xlu0 %1093
    %1096 = vset.pattern.permute.xlu0 2
    %1097 = vperm.xlu0 %1096, %v75
    %v1098 = vpop.permute.xlu0 %1097
    %1100 = vset.pattern.permute.xlu0 2
    %1101 = vperm.xlu0 %1100, %v76
    %v1102 = vpop.permute.xlu0 %1101
    %1104 = vset.pattern.permute.xlu0 2
    %1105 = vperm.xlu0 %1104, %v77
    %v1106 = vpop.permute.xlu0 %1105
    %1108 = vset.pattern.permute.xlu0 2
    %1109 = vperm.xlu0 %1108, %v78
    %v1110 = vpop.permute.xlu0 %1109
    %v1112 = vlaneseq
    %v1113 = vshrl.u32 %v1112, 7
    %v1114 = vsub.s32 2, %v1113
    %v1115 = vrot.slane %v79, %v1114
    %v1116 = vmul.f32 %v858, %v1115
    %v1117 = vmul.f32 %v862, %v1115
    %v1118 = vmul.f32 %v866, %v1115
    %v1119 = vmul.f32 %v870, %v1115
    %v1120 = vmul.f32 %v874, %v1115
    %v1121 = vmul.f32 %v878, %v1115
    %v1122 = vmul.f32 %v882, %v1115
    %v1123 = vmul.f32 %v886, %v1115
    %v1124 = vmul.f32 %v890, %v1115
    %v1125 = vmul.f32 %v894, %v1115
    %v1126 = vmul.f32 %v898, %v1115
    %v1127 = vmul.f32 %v902, %v1115
    %v1128 = vmul.f32 %v906, %v1115
    %v1129 = vmul.f32 %v910, %v1115
    %v1130 = vmul.f32 %v914, %v1115
    %v1131 = vmul.f32 %v918, %v1115
    %v1132 = vmul.f32 %v922, %v1115
    %v1133 = vmul.f32 %v926, %v1115
    %v1134 = vmul.f32 %v930, %v1115
    %v1135 = vmul.f32 %v934, %v1115
    %v1136 = vmul.f32 %v938, %v1115
    %v1137 = vmul.f32 %v942, %v1115
    %v1138 = vmul.f32 %v946, %v1115
    %v1139 = vmul.f32 %v950, %v1115
    %v1140 = vmul.f32 %v954, %v1115
    %v1141 = vmul.f32 %v958, %v1115
    %v1142 = vmul.f32 %v962, %v1115
    %v1143 = vmul.f32 %v966, %v1115
    %v1144 = vmul.f32 %v970, %v1115
    %v1145 = vmul.f32 %v974, %v1115
    %v1146 = vmul.f32 %v978, %v1115
    %v1147 = vmul.f32 %v982, %v1115
    %v1148 = vmul.f32 %v986, %v1115
    %v1149 = vmul.f32 %v990, %v1115
    %v1150 = vmul.f32 %v994, %v1115
    %v1151 = vmul.f32 %v998, %v1115
    %v1152 = vmul.f32 %v1002, %v1115
    %v1153 = vmul.f32 %v1006, %v1115
    %v1154 = vmul.f32 %v1010, %v1115
    %v1155 = vmul.f32 %v1014, %v1115
    %v1156 = vmul.f32 %v1018, %v1115
    %v1157 = vmul.f32 %v1022, %v1115
    %v1158 = vmul.f32 %v1026, %v1115
    %v1159 = vmul.f32 %v1030, %v1115
    %v1160 = vmul.f32 %v1034, %v1115
    %v1161 = vmul.f32 %v1038, %v1115
    %v1162 = vmul.f32 %v1042, %v1115
    %v1163 = vmul.f32 %v1046, %v1115
    %v1164 = vmul.f32 %v1050, %v1115
    %v1165 = vmul.f32 %v1054, %v1115
    %v1166 = vmul.f32 %v1058, %v1115
    %v1167 = vmul.f32 %v1062, %v1115
    %v1168 = vmul.f32 %v1066, %v1115
    %v1169 = vmul.f32 %v1070, %v1115
    %v1170 = vmul.f32 %v1074, %v1115
    %v1171 = vmul.f32 %v1078, %v1115
    %v1172 = vmul.f32 %v1082, %v1115
    %v1173 = vmul.f32 %v1086, %v1115
    %v1174 = vmul.f32 %v1090, %v1115
    %v1175 = vmul.f32 %v1094, %v1115
    %v1176 = vmul.f32 %v1098, %v1115
    %v1177 = vmul.f32 %v1102, %v1115
    %v1178 = vmul.f32 %v1106, %v1115
    %v1179 = vmul.f32 %v1110, %v1115
    %v1180 = vadd.f32 %v792, %v1116
    %v1181 = vadd.f32 %v793, %v1117
    %v1182 = vadd.f32 %v794, %v1118
    %v1183 = vadd.f32 %v795, %v1119
    %v1184 = vadd.f32 %v796, %v1120
    %v1185 = vadd.f32 %v797, %v1121
    %v1186 = vadd.f32 %v798, %v1122
    %v1187 = vadd.f32 %v799, %v1123
    %v1188 = vadd.f32 %v800, %v1124
    %v1189 = vadd.f32 %v801, %v1125
    %v1190 = vadd.f32 %v802, %v1126
    %v1191 = vadd.f32 %v803, %v1127
    %v1192 = vadd.f32 %v804, %v1128
    %v1193 = vadd.f32 %v805, %v1129
    %v1194 = vadd.f32 %v806, %v1130
    %v1195 = vadd.f32 %v807, %v1131
    %v1196 = vadd.f32 %v808, %v1132
    %v1197 = vadd.f32 %v809, %v1133
    %v1198 = vadd.f32 %v810, %v1134
    %v1199 = vadd.f32 %v811, %v1135
    %v1200 = vadd.f32 %v812, %v1136
    %v1201 = vadd.f32 %v813, %v1137
    %v1202 = vadd.f32 %v814, %v1138
    %v1203 = vadd.f32 %v815, %v1139
    %v1204 = vadd.f32 %v816, %v1140
    %v1205 = vadd.f32 %v817, %v1141
    %v1206 = vadd.f32 %v818, %v1142
    %v1207 = vadd.f32 %v819, %v1143
    %v1208 = vadd.f32 %v820, %v1144
    %v1209 = vadd.f32 %v821, %v1145
    %v1210 = vadd.f32 %v822, %v1146
    %v1211 = vadd.f32 %v823, %v1147
    %v1212 = vadd.f32 %v824, %v1148
    %v1213 = vadd.f32 %v825, %v1149
    %v1214 = vadd.f32 %v826, %v1150
    %v1215 = vadd.f32 %v827, %v1151
    %v1216 = vadd.f32 %v828, %v1152
    %v1217 = vadd.f32 %v829, %v1153
    %v1218 = vadd.f32 %v830, %v1154
    %v1219 = vadd.f32 %v831, %v1155
    %v1220 = vadd.f32 %v832, %v1156
    %v1221 = vadd.f32 %v833, %v1157
    %v1222 = vadd.f32 %v834, %v1158
    %v1223 = vadd.f32 %v835, %v1159
    %v1224 = vadd.f32 %v836, %v1160
    %v1225 = vadd.f32 %v837, %v1161
    %v1226 = vadd.f32 %v838, %v1162
    %v1227 = vadd.f32 %v839, %v1163
    %v1228 = vadd.f32 %v840, %v1164
    %v1229 = vadd.f32 %v841, %v1165
    %v1230 = vadd.f32 %v842, %v1166
    %v1231 = vadd.f32 %v843, %v1167
    %v1232 = vadd.f32 %v844, %v1168
    %v1233 = vadd.f32 %v845, %v1169
    %v1234 = vadd.f32 %v846, %v1170
    %v1235 = vadd.f32 %v847, %v1171
    %v1236 = vadd.f32 %v848, %v1172
    %v1237 = vadd.f32 %v849, %v1173
    %v1238 = vadd.f32 %v850, %v1174
    %v1239 = vadd.f32 %v851, %v1175
    %v1240 = vadd.f32 %v852, %v1176
    %v1241 = vadd.f32 %v853, %v1177
    %v1242 = vadd.f32 %v854, %v1178
    %v1243 = vadd.f32 %v855, %v1179
    %v1244 = vld [vmem:[%s2] sm:$0x1]
    %v1246 = vlaneseq
    %v1247 = vshrl.u32 %v1246, 7
    %v1248 = vsub.s32 0, %v1247
    %v1249 = vrot.slane %v1244, %v1248
    %v1251 = vadd.f32 %v1180, %v1249
    %v1252 = vadd.f32 %v1181, %v1249
    %v1253 = vadd.f32 %v1182, %v1249
    %v1254 = vadd.f32 %v1183, %v1249
    %v1255 = vadd.f32 %v1184, %v1249
    %v1256 = vadd.f32 %v1185, %v1249
    %v1257 = vadd.f32 %v1186, %v1249
    %v1258 = vadd.f32 %v1187, %v1249
    %v1259 = vadd.f32 %v1188, %v1249
    %v1260 = vadd.f32 %v1189, %v1249
    %v1261 = vadd.f32 %v1190, %v1249
    %v1262 = vadd.f32 %v1191, %v1249
    %v1263 = vadd.f32 %v1192, %v1249
    %v1264 = vadd.f32 %v1193, %v1249
    %v1265 = vadd.f32 %v1194, %v1249
    %v1266 = vadd.f32 %v1195, %v1249
    %v1267 = vadd.f32 %v1196, %v1249
    %v1268 = vadd.f32 %v1197, %v1249
    %v1269 = vadd.f32 %v1198, %v1249
    %v1270 = vadd.f32 %v1199, %v1249
    %v1271 = vadd.f32 %v1200, %v1249
    %v1272 = vadd.f32 %v1201, %v1249
    %v1273 = vadd.f32 %v1202, %v1249
    %v1274 = vadd.f32 %v1203, %v1249
    %v1275 = vadd.f32 %v1204, %v1249
    %v1276 = vadd.f32 %v1205, %v1249
    %v1277 = vadd.f32 %v1206, %v1249
    %v1278 = vadd.f32 %v1207, %v1249
    %v1279 = vadd.f32 %v1208, %v1249
    %v1280 = vadd.f32 %v1209, %v1249
    %v1281 = vadd.f32 %v1210, %v1249
    %v1282 = vadd.f32 %v1211, %v1249
    %v1283 = vadd.f32 %v1212, %v1249
    %v1284 = vadd.f32 %v1213, %v1249
    %v1285 = vadd.f32 %v1214, %v1249
    %v1286 = vadd.f32 %v1215, %v1249
    %v1287 = vadd.f32 %v1216, %v1249
    %v1288 = vadd.f32 %v1217, %v1249
    %v1289 = vadd.f32 %v1218, %v1249
    %v1290 = vadd.f32 %v1219, %v1249
    %v1291 = vadd.f32 %v1220, %v1249
    %v1292 = vadd.f32 %v1221, %v1249
    %v1293 = vadd.f32 %v1222, %v1249
    %v1294 = vadd.f32 %v1223, %v1249
    %v1295 = vadd.f32 %v1224, %v1249
    %v1296 = vadd.f32 %v1225, %v1249
    %v1297 = vadd.f32 %v1226, %v1249
    %v1298 = vadd.f32 %v1227, %v1249
    %v1299 = vadd.f32 %v1228, %v1249
    %v1300 = vadd.f32 %v1229, %v1249
    %v1301 = vadd.f32 %v1230, %v1249
    %v1302 = vadd.f32 %v1231, %v1249
    %v1303 = vadd.f32 %v1232, %v1249
    %v1304 = vadd.f32 %v1233, %v1249
    %v1305 = vadd.f32 %v1234, %v1249
    %v1306 = vadd.f32 %v1235, %v1249
    %v1307 = vadd.f32 %v1236, %v1249
    %v1308 = vadd.f32 %v1237, %v1249
    %v1309 = vadd.f32 %v1238, %v1249
    %v1310 = vadd.f32 %v1239, %v1249
    %v1311 = vadd.f32 %v1240, %v1249
    %v1312 = vadd.f32 %v1241, %v1249
    %v1313 = vadd.f32 %v1242, %v1249
    %v1314 = vadd.f32 %v1243, %v1249
    %1315 = vst [vmem:[#allocation2] sm:$0xff] %v1251
    %1316 = vst [vmem:[#allocation2 + $0x8] sm:$0xff] %v1252
    %1317 = vst [vmem:[#allocation2 + $0x10] sm:$0xff] %v1253
    %1318 = vst [vmem:[#allocation2 + $0x18] sm:$0xff] %v1254
    %1319 = vst [vmem:[#allocation2 + $0x20] sm:$0xff] %v1255
    %1320 = vst [vmem:[#allocation2 + $0x28] sm:$0xff] %v1256
    %1321 = vst [vmem:[#allocation2 + $0x30] sm:$0xff] %v1257
    %1322 = vst [vmem:[#allocation2 + $0x38] sm:$0xff] %v1258
    %1323 = vst [vmem:[#allocation2 + $0x40] sm:$0xff] %v1259
    %1324 = vst [vmem:[#allocation2 + $0x48] sm:$0xff] %v1260
    %1325 = vst [vmem:[#allocation2 + $0x50] sm:$0xff] %v1261
    %1326 = vst [vmem:[#allocation2 + $0x58] sm:$0xff] %v1262
    %1327 = vst [vmem:[#allocation2 + $0x60] sm:$0xff] %v1263
    %1328 = vst [vmem:[#allocation2 + $0x68] sm:$0xff] %v1264
    %1329 = vst [vmem:[#allocation2 + $0x70] sm:$0xff] %v1265
    %1330 = vst [vmem:[#allocation2 + $0x78] sm:$0xff] %v1266
    %1331 = vst [vmem:[#allocation2 + $0x80] sm:$0xff] %v1267
    %1332 = vst [vmem:[#allocation2 + $0x88] sm:$0xff] %v1268
    %1333 = vst [vmem:[#allocation2 + $0x90] sm:$0xff] %v1269
    %1334 = vst [vmem:[#allocation2 + $0x98] sm:$0xff] %v1270
    %1335 = vst [vmem:[#allocation2 + $0xa0] sm:$0xff] %v1271
    %1336 = vst [vmem:[#allocation2 + $0xa8] sm:$0xff] %v1272
    %1337 = vst [vmem:[#allocation2 + $0xb0] sm:$0xff] %v1273
    %1338 = vst [vmem:[#allocation2 + $0xb8] sm:$0xff] %v1274
    %1339 = vst [vmem:[#allocation2 + $0xc0] sm:$0xff] %v1275
    %1340 = vst [vmem:[#allocation2 + $0xc8] sm:$0xff] %v1276
    %1341 = vst [vmem:[#allocation2 + $0xd0] sm:$0xff] %v1277
    %1342 = vst [vmem:[#allocation2 + $0xd8] sm:$0xff] %v1278
    %1343 = vst [vmem:[#allocation2 + $0xe0] sm:$0xff] %v1279
    %1344 = vst [vmem:[#allocation2 + $0xe8] sm:$0xff] %v1280
    %1345 = vst [vmem:[#allocation2 + $0xf0] sm:$0xff] %v1281
    %1346 = vst [vmem:[#allocation2 + $0xf8] sm:$0xff] %v1282
    %1347 = vst [vmem:[#allocation2 + $0x100] sm:$0xff] %v1283
    %1348 = vst [vmem:[#allocation2 + $0x108] sm:$0xff] %v1284
    %1349 = vst [vmem:[#allocation2 + $0x110] sm:$0xff] %v1285
    %1350 = vst [vmem:[#allocation2 + $0x118] sm:$0xff] %v1286
    %1351 = vst [vmem:[#allocation2 + $0x120] sm:$0xff] %v1287
    %1352 = vst [vmem:[#allocation2 + $0x128] sm:$0xff] %v1288
    %1353 = vst [vmem:[#allocation2 + $0x130] sm:$0xff] %v1289
    %1354 = vst [vmem:[#allocation2 + $0x138] sm:$0xff] %v1290
    %1355 = vst [vmem:[#allocation2 + $0x140] sm:$0xff] %v1291
    %1356 = vst [vmem:[#allocation2 + $0x148] sm:$0xff] %v1292
    %1357 = vst [vmem:[#allocation2 + $0x150] sm:$0xff] %v1293
    %1358 = vst [vmem:[#allocation2 + $0x158] sm:$0xff] %v1294
    %1359 = vst [vmem:[#allocation2 + $0x160] sm:$0xff] %v1295
    %1360 = vst [vmem:[#allocation2 + $0x168] sm:$0xff] %v1296
    %1361 = vst [vmem:[#allocation2 + $0x170] sm:$0xff] %v1297
    %1362 = vst [vmem:[#allocation2 + $0x178] sm:$0xff] %v1298
    %1363 = vst [vmem:[#allocation2 + $0x180] sm:$0xff] %v1299
    %1364 = vst [vmem:[#allocation2 + $0x188] sm:$0xff] %v1300
    %1365 = vst [vmem:[#allocation2 + $0x190] sm:$0xff] %v1301
    %1366 = vst [vmem:[#allocation2 + $0x198] sm:$0xff] %v1302
    %1367 = vst [vmem:[#allocation2 + $0x1a0] sm:$0xff] %v1303
    %1368 = vst [vmem:[#allocation2 + $0x1a8] sm:$0xff] %v1304
    %1369 = vst [vmem:[#allocation2 + $0x1b0] sm:$0xff] %v1305
    %1370 = vst [vmem:[#allocation2 + $0x1b8] sm:$0xff] %v1306
    %1371 = vst [vmem:[#allocation2 + $0x1c0] sm:$0xff] %v1307
    %1372 = vst [vmem:[#allocation2 + $0x1c8] sm:$0xff] %v1308
    %1373 = vst [vmem:[#allocation2 + $0x1d0] sm:$0xff] %v1309
    %1374 = vst [vmem:[#allocation2 + $0x1d8] sm:$0xff] %v1310
    %1375 = vst [vmem:[#allocation2 + $0x1e0] sm:$0xff] %v1311
    %1376 = vst [vmem:[#allocation2 + $0x1e8] sm:$0xff] %v1312
    %1377 = vst [vmem:[#allocation2 + $0x1f0] sm:$0xff] %v1313
    %1378 = vst [vmem:[#allocation2 + $0x1f8] sm:$0xff] %v1314
    // Predicated region
    $region14: #{tpu_custom_call.1} parent=1 // pred_check
      _
    $region15: #{tpu_custom_call.1} parent=1 // pred_check_branch
      %1380 = sbr.rel (0) target = $region17
    $region16: #{tpu_custom_call.1} parent=1 // pred_region
      %s1382 = ssub.s32 8192, 8192
      %1383 = vsyncadd [#allocation3], %s1382
      %s1384 = sshll.u32 [#allocation2], 4
      %s1385 = int_to_ptr.vmem [resolvable:$true] %s1384
      %1390 = dma.vmem_to_hbm [thread:$0]  %s1385, 8192, %s3, [#allocation3], 128, 128, 8
    $region17: #{tpu_custom_call.1} parent=1 // pred_fallthru
      _
    // Predicated region
    $region18: #{tpu_custom_call.1} parent=1 // pred_check
      _
    $region19: #{tpu_custom_call.1} parent=1 // pred_check_branch
      %1392 = sbr.rel (0) target = $region21
    $region20: #{tpu_custom_call.1} parent=1 // pred_region
      %1393 = dma.done [#allocation3], 8192
    $region21: #{tpu_custom_call.1} parent=1 // pred_fallthru
      _
    %1394 = vsyncpa [#allocation3], 1

</llo_original>
